<compile_context>
chip_gen: v7x
topology: tpu7x:2x2x1
jax: 0.10.0
libtpu: 0.0.40
codegen_flags: <defaults>
</compile_context>

<pallas_src>
import math

import jax
import jax.numpy as jnp
from jax.experimental import pallas as pl
from jax.experimental.pallas import tpu as pltpu


# ----------------------------------------------------------------------------
# Layer sizes and offsets into the packed parameter slab (row-major W[k, j],
# weights stored (in_features, out_features); last layer folded to one column).
# ----------------------------------------------------------------------------
IN1, H1, H2, OUT = 4, 10, 5, 2
CHUNK = 8  # sublane depth of one f32 vreg; inner-loop chunk size

W1_OFF = 0
B1_OFF = W1_OFF + IN1 * H1          # 40
W2_OFF = B1_OFF + H1                # 50
B2_OFF = W2_OFF + H1 * H2           # 100
W3D_OFF = B2_OFF + H2               # 105  (w3[:,1] - w3[:,0], 5 values)
B3D_OFF = W3D_OFF + H2              # 110  (b3[1] - b3[0], 1 value)
N_PARAMS = B3D_OFF + 1              # 111


def _cdiv(a, b):
    return -(-a // b)


def _round_up(a, m):
    return _cdiv(a, m) * m


def policy_kernel(params_ref, x_ref, o_ref):
    """One batch tile: x_ref (IN1, block_rows, 128) -> o_ref (OUT, block_rows, 128).

    params_ref is the flat f32 parameter slab (scalar-prefetched into SMEM);
    every weight/bias is a cheap scalar read that broadcasts over a full
    (CHUNK, 128) vreg on the VPU. No MXU, no cross-lane reductions. The inner
    fori_loop over CHUNK-sublane slices keeps the live set ~20 vregs even for
    very large tiles.
    """
    block_rows = x_ref.shape[1]
    n_chunks = block_rows // CHUNK  # static

    def dense(rows, in_f, out_f, w_off, b_off, relu):
        outs = []
        for j in range(out_f):
            acc = rows[0] * params_ref[w_off + j]                  # k = 0
            for k in range(1, in_f):
                acc = acc + rows[k] * params_ref[w_off + k * out_f + j]
            acc = acc + params_ref[b_off + j]
            if relu:
                acc = jnp.maximum(acc, 0.0)
            outs.append(acc)
        return outs

    def chunk_body(c, carry):
        base = pl.multiple_of(c * CHUNK, CHUNK)
        rows = [x_ref[k, pl.ds(base, CHUNK), :].astype(jnp.float32)
                for k in range(IN1)]

        h1 = dense(rows, IN1, H1, W1_OFF, B1_OFF, relu=True)   # 10 rows
        h2 = dense(h1, H1, H2, W2_OFF, B2_OFF, relu=True)      # 5 rows
        # Folded last layer: d = logit1 - logit0 directly (5-wide dense).
        d = dense(h2, H2, 1, W3D_OFF, B3D_OFF, relu=False)[0]

        # Binary softmax via the sigmoid identity (numerically stable; both
        # sigmoids go to the EUP so the binding VALU slot stays free).
        o_ref[0, pl.ds(base, CHUNK), :] = jax.nn.sigmoid(-d)    # p0
        o_ref[1, pl.ds(base, CHUNK), :] = jax.nn.sigmoid(d)     # p1
        return carry

    jax.lax.fori_loop(0, n_chunks, chunk_body, 0)


def pack_params(w1, b1, w2, b2, w3, b3):
    """Pack all parameters into one flat f32 slab.

    Weights are stored (in_features, out_features), row-major, so the kernel
    reads W[k, j] at w_off + k * out_features + j. The final layer is folded
    into its logit-difference column (softmax over 2 classes only needs it).
    """
    w3d = (w3[:, 1] - w3[:, 0]).reshape(-1)
    b3d = jnp.reshape(b3[1] - b3[0], (1,))
    return jnp.concatenate(
        [w1.reshape(-1), b1.reshape(-1),
         w2.reshape(-1), b2.reshape(-1),
         w3d, b3d]
    ).astype(jnp.float32)


def _choose_tiling(batch, requested_block_rows):
    """Pick (block_rows, num_tiles, total_rows) for a batch of `batch` samples.

    block_rows is a multiple of CHUNK; when there is enough data we keep at
    least 2 grid steps so the "parallel" axis can shard across v7x's two TCs.
    """
    rows_needed = max(_cdiv(batch, 128), 1)
    rows_chunked = _round_up(rows_needed, CHUNK)
    br = max(CHUNK, _round_up(requested_block_rows, CHUNK))
    br = min(br, rows_chunked)
    if rows_chunked >= 2 * CHUNK:
        br = min(br, _round_up(_cdiv(rows_chunked, 2), CHUNK))
    num_tiles = _cdiv(rows_chunked, br)
    total_rows = num_tiles * br
    return br, num_tiles, total_rows


def policy_forward_feature_major(x_fm, packed_params, *, block_rows=256):
    """Fast path. x_fm: (4, B) feature-major f32. Returns probabilities (2, B).

    The batch is padded up to a whole number of tiles, viewed as
    (features, total_rows, 128) so batch fills sublanes AND lanes, and tiled
    over a 1-D "parallel" grid. Default block_rows=256 gives ~0.5 MiB input
    blocks (32K samples/step), amortizing the ~0.35 us per-step overhead;
    VMEM use stays < 2 MiB even double-buffered, fine on v5e/v6e/v7x.
    """
    assert x_fm.shape[0] == IN1
    B = x_fm.shape[1]
    br, num_tiles, total_rows = _choose_tiling(B, block_rows)
    bp = total_rows * 128

    # Cheap last-dim zero pad (no transpose, no gather); padded rows produce
    # bounded values and are sliced off below.
    x_pad = jnp.pad(x_fm.astype(jnp.float32), ((0, 0), (0, bp - B)))
    x3 = x_pad.reshape(IN1, total_rows, 128)

    out3 = pl.pallas_call(
        policy_kernel,
        out_shape=jax.ShapeDtypeStruct((OUT, total_rows, 128), jnp.float32),
        grid_spec=pltpu.PrefetchScalarGridSpec(
            num_scalar_prefetch=1,          # packed param slab -> SMEM, once
            grid=(num_tiles,),
            in_specs=[
                pl.BlockSpec((IN1, br, 128), lambda i, params: (0, i, 0)),
            ],
            out_specs=pl.BlockSpec((OUT, br, 128), lambda i, params: (0, i, 0)),
        ),
        compiler_params=pltpu.CompilerParams(
            dimension_semantics=("parallel",),
        ),
    )(packed_params, x3)

    return out3.reshape(OUT, bp)[:, :B]


def policy_forward(x, packed_params, *, block_rows=256):
    """Module-shape convenience wrapper. x: (B, 4) -> probabilities (B, 2).

    The in/out transposes here are pure layout plumbing; performance-sensitive
    callers should keep activations feature-major and call
    `policy_forward_feature_major` directly.
    """
    return policy_forward_feature_major(x.T, packed_params,
                                        block_rows=block_rows).T


def init_linear(key, fan_in, fan_out):
    """Deterministic init mimicking torch.nn.Linear default U(-k, k), k=1/sqrt(fan_in).
    Returns W as (fan_in, fan_out) and b as (fan_out,)."""
    kw, kb = jax.random.split(key)
    bound = 1.0 / math.sqrt(fan_in)
    w = jax.random.uniform(kw, (fan_in, fan_out), jnp.float32, -bound, bound)
    b = jax.random.uniform(kb, (fan_out,), jnp.float32, -bound, bound)
    return w, b


def reference_forward(x, params):
    """Pure-JAX reference for the intended chain (unfolded last layer)."""
    w1, b1, w2, b2, w3, b3 = params
    h1 = jnp.maximum(x @ w1 + b1, 0.0)
    h2 = jnp.maximum(h1 @ w2 + b2, 0.0)
    return jax.nn.softmax(h2 @ w3 + b3, axis=-1)


if __name__ == "__main__":
    key = jax.random.PRNGKey(0)
    k_x, k1, k2, k3 = jax.random.split(key, 4)

    w1, b1 = init_linear(k1, IN1, H1)
    w2, b2 = init_linear(k2, H1, H2)
    w3, b3 = init_linear(k3, H2, OUT)
    params = (w1, b1, w2, b2, w3, b3)
    packed = pack_params(*params)
    assert packed.shape == (N_PARAMS,)

    # Small batch with the module's natural shapes: (B, 4) -> (B, 2).
    B = 8
    x = jax.random.normal(k_x, (B, IN1), jnp.float32)
    out = jax.block_until_ready(policy_forward(x, packed))
    ref = reference_forward(x, params)
    assert out.shape == (B, OUT)
    assert jnp.allclose(out, ref, atol=1e-5, rtol=1e-5)
    # rows of a softmax sum to 1
    assert jnp.allclose(jnp.sum(out, axis=-1), jnp.ones((B,)), atol=1e-5)

    # Larger, non-multiple-of-tile batch via the feature-major fast path:
    # exercises padding, the >=2-tile "parallel" grid, and the inner chunk loop.
    B2 = 5000
    x2 = jax.random.normal(k_x, (B2, IN1), jnp.float32)
    out2_fm = jax.block_until_ready(
        policy_forward_feature_major(x2.T, packed, block_rows=64))
    ref2 = reference_forward(x2, params)
    assert out2_fm.shape == (OUT, B2)
    assert jnp.allclose(out2_fm.T, ref2, atol=1e-5, rtol=1e-5)

    print("KERNEL_OK")
</pallas_src>

<mosaic_0001>
module attributes {stable_mosaic.version = 11 : i64} {
  func.func @policy_kernel(%arg0: i32, %arg1: memref<111xf32, #tpu.memory_space<smem>>, %arg2: memref<4x8x128xf32, #tpu.memory_space<vmem>>, %arg3: memref<2x8x128xf32, #tpu.memory_space<vmem>>) attributes {dimension_semantics = [#tpu.dimension_semantics<parallel>], iteration_bounds = array<i64: 1>, scalar_prefetch = 1 : i64, scratch_operands = 0 : i64, tpu.core_type = #tpu.core_type<tc>, window_params = [{transform_indices = @transform_0, window_bounds = array<i64: 4, 8, 128>}, {transform_indices = @transform_1, window_bounds = array<i64: 2, 8, 128>}]} {
    %c0_i32 = arith.constant 0 : i32
    %c8_i32 = arith.constant 8 : i32
    %0 = arith.muli %c0_i32, %c8_i32 : i32
    %1 = tpu.assume_multiple %0, 8 : i32
    %c0 = arith.constant 0 : index
    %2 = arith.index_cast %1 : i32 to index
    %c0_0 = arith.constant 0 : index
    %3 = vector.load %arg2[%c0, %2, %c0_0] : memref<4x8x128xf32, #tpu.memory_space<vmem>>, vector<1x8x128xf32>
    %4 = vector.shape_cast %3 : vector<1x8x128xf32> to vector<8x128xf32>
    %c1 = arith.constant 1 : index
    %5 = arith.index_cast %1 : i32 to index
    %c0_1 = arith.constant 0 : index
    %6 = vector.load %arg2[%c1, %5, %c0_1] : memref<4x8x128xf32, #tpu.memory_space<vmem>>, vector<1x8x128xf32>
    %7 = vector.shape_cast %6 : vector<1x8x128xf32> to vector<8x128xf32>
    %c2 = arith.constant 2 : index
    %8 = arith.index_cast %1 : i32 to index
    %c0_2 = arith.constant 0 : index
    %9 = vector.load %arg2[%c2, %8, %c0_2] : memref<4x8x128xf32, #tpu.memory_space<vmem>>, vector<1x8x128xf32>
    %10 = vector.shape_cast %9 : vector<1x8x128xf32> to vector<8x128xf32>
    %c3 = arith.constant 3 : index
    %11 = arith.index_cast %1 : i32 to index
    %c0_3 = arith.constant 0 : index
    %12 = vector.load %arg2[%c3, %11, %c0_3] : memref<4x8x128xf32, #tpu.memory_space<vmem>>, vector<1x8x128xf32>
    %13 = vector.shape_cast %12 : vector<1x8x128xf32> to vector<8x128xf32>
    %c0_4 = arith.constant 0 : index
    %14 = memref.load %arg1[%c0_4] : memref<111xf32, #tpu.memory_space<smem>>
    %15 = vector.broadcast %14 : f32 to vector<8x128xf32>
    %16 = arith.mulf %4, %15 : vector<8x128xf32>
    %c10 = arith.constant 10 : index
    %17 = memref.load %arg1[%c10] : memref<111xf32, #tpu.memory_space<smem>>
    %18 = vector.broadcast %17 : f32 to vector<8x128xf32>
    %19 = arith.mulf %7, %18 : vector<8x128xf32>
    %20 = arith.addf %16, %19 : vector<8x128xf32>
    %c20 = arith.constant 20 : index
    %21 = memref.load %arg1[%c20] : memref<111xf32, #tpu.memory_space<smem>>
    %22 = vector.broadcast %21 : f32 to vector<8x128xf32>
    %23 = arith.mulf %10, %22 : vector<8x128xf32>
    %24 = arith.addf %20, %23 : vector<8x128xf32>
    %c30 = arith.constant 30 : index
    %25 = memref.load %arg1[%c30] : memref<111xf32, #tpu.memory_space<smem>>
    %26 = vector.broadcast %25 : f32 to vector<8x128xf32>
    %27 = arith.mulf %13, %26 : vector<8x128xf32>
    %28 = arith.addf %24, %27 : vector<8x128xf32>
    %c40 = arith.constant 40 : index
    %29 = memref.load %arg1[%c40] : memref<111xf32, #tpu.memory_space<smem>>
    %30 = vector.broadcast %29 : f32 to vector<8x128xf32>
    %31 = arith.addf %28, %30 : vector<8x128xf32>
    %cst = arith.constant 0.000000e+00 : f32
    %32 = vector.broadcast %cst : f32 to vector<8x128xf32>
    %33 = arith.maximumf %31, %32 : vector<8x128xf32>
    %c1_5 = arith.constant 1 : index
    %34 = memref.load %arg1[%c1_5] : memref<111xf32, #tpu.memory_space<smem>>
    %35 = vector.broadcast %34 : f32 to vector<8x128xf32>
    %36 = arith.mulf %4, %35 : vector<8x128xf32>
    %c11 = arith.constant 11 : index
    %37 = memref.load %arg1[%c11] : memref<111xf32, #tpu.memory_space<smem>>
    %38 = vector.broadcast %37 : f32 to vector<8x128xf32>
    %39 = arith.mulf %7, %38 : vector<8x128xf32>
    %40 = arith.addf %36, %39 : vector<8x128xf32>
    %c21 = arith.constant 21 : index
    %41 = memref.load %arg1[%c21] : memref<111xf32, #tpu.memory_space<smem>>
    %42 = vector.broadcast %41 : f32 to vector<8x128xf32>
    %43 = arith.mulf %10, %42 : vector<8x128xf32>
    %44 = arith.addf %40, %43 : vector<8x128xf32>
    %c31 = arith.constant 31 : index
    %45 = memref.load %arg1[%c31] : memref<111xf32, #tpu.memory_space<smem>>
    %46 = vector.broadcast %45 : f32 to vector<8x128xf32>
    %47 = arith.mulf %13, %46 : vector<8x128xf32>
    %48 = arith.addf %44, %47 : vector<8x128xf32>
    %c41 = arith.constant 41 : index
    %49 = memref.load %arg1[%c41] : memref<111xf32, #tpu.memory_space<smem>>
    %50 = vector.broadcast %49 : f32 to vector<8x128xf32>
    %51 = arith.addf %48, %50 : vector<8x128xf32>
    %cst_6 = arith.constant 0.000000e+00 : f32
    %52 = vector.broadcast %cst_6 : f32 to vector<8x128xf32>
    %53 = arith.maximumf %51, %52 : vector<8x128xf32>
    %c2_7 = arith.constant 2 : index
    %54 = memref.load %arg1[%c2_7] : memref<111xf32, #tpu.memory_space<smem>>
    %55 = vector.broadcast %54 : f32 to vector<8x128xf32>
    %56 = arith.mulf %4, %55 : vector<8x128xf32>
    %c12 = arith.constant 12 : index
    %57 = memref.load %arg1[%c12] : memref<111xf32, #tpu.memory_space<smem>>
    %58 = vector.broadcast %57 : f32 to vector<8x128xf32>
    %59 = arith.mulf %7, %58 : vector<8x128xf32>
    %60 = arith.addf %56, %59 : vector<8x128xf32>
    %c22 = arith.constant 22 : index
    %61 = memref.load %arg1[%c22] : memref<111xf32, #tpu.memory_space<smem>>
    %62 = vector.broadcast %61 : f32 to vector<8x128xf32>
    %63 = arith.mulf %10, %62 : vector<8x128xf32>
    %64 = arith.addf %60, %63 : vector<8x128xf32>
    %c32 = arith.constant 32 : index
    %65 = memref.load %arg1[%c32] : memref<111xf32, #tpu.memory_space<smem>>
    %66 = vector.broadcast %65 : f32 to vector<8x128xf32>
    %67 = arith.mulf %13, %66 : vector<8x128xf32>
    %68 = arith.addf %64, %67 : vector<8x128xf32>
    %c42 = arith.constant 42 : index
    %69 = memref.load %arg1[%c42] : memref<111xf32, #tpu.memory_space<smem>>
    %70 = vector.broadcast %69 : f32 to vector<8x128xf32>
    %71 = arith.addf %68, %70 : vector<8x128xf32>
    %cst_8 = arith.constant 0.000000e+00 : f32
    %72 = vector.broadcast %cst_8 : f32 to vector<8x128xf32>
    %73 = arith.maximumf %71, %72 : vector<8x128xf32>
    %c3_9 = arith.constant 3 : index
    %74 = memref.load %arg1[%c3_9] : memref<111xf32, #tpu.memory_space<smem>>
    %75 = vector.broadcast %74 : f32 to vector<8x128xf32>
    %76 = arith.mulf %4, %75 : vector<8x128xf32>
    %c13 = arith.constant 13 : index
    %77 = memref.load %arg1[%c13] : memref<111xf32, #tpu.memory_space<smem>>
    %78 = vector.broadcast %77 : f32 to vector<8x128xf32>
    %79 = arith.mulf %7, %78 : vector<8x128xf32>
    %80 = arith.addf %76, %79 : vector<8x128xf32>
    %c23 = arith.constant 23 : index
    %81 = memref.load %arg1[%c23] : memref<111xf32, #tpu.memory_space<smem>>
    %82 = vector.broadcast %81 : f32 to vector<8x128xf32>
    %83 = arith.mulf %10, %82 : vector<8x128xf32>
    %84 = arith.addf %80, %83 : vector<8x128xf32>
    %c33 = arith.constant 33 : index
    %85 = memref.load %arg1[%c33] : memref<111xf32, #tpu.memory_space<smem>>
    %86 = vector.broadcast %85 : f32 to vector<8x128xf32>
    %87 = arith.mulf %13, %86 : vector<8x128xf32>
    %88 = arith.addf %84, %87 : vector<8x128xf32>
    %c43 = arith.constant 43 : index
    %89 = memref.load %arg1[%c43] : memref<111xf32, #tpu.memory_space<smem>>
    %90 = vector.broadcast %89 : f32 to vector<8x128xf32>
    %91 = arith.addf %88, %90 : vector<8x128xf32>
    %cst_10 = arith.constant 0.000000e+00 : f32
    %92 = vector.broadcast %cst_10 : f32 to vector<8x128xf32>
    %93 = arith.maximumf %91, %92 : vector<8x128xf32>
    %c4 = arith.constant 4 : index
    %94 = memref.load %arg1[%c4] : memref<111xf32, #tpu.memory_space<smem>>
    %95 = vector.broadcast %94 : f32 to vector<8x128xf32>
    %96 = arith.mulf %4, %95 : vector<8x128xf32>
    %c14 = arith.constant 14 : index
    %97 = memref.load %arg1[%c14] : memref<111xf32, #tpu.memory_space<smem>>
    %98 = vector.broadcast %97 : f32 to vector<8x128xf32>
    %99 = arith.mulf %7, %98 : vector<8x128xf32>
    %100 = arith.addf %96, %99 : vector<8x128xf32>
    %c24 = arith.constant 24 : index
    %101 = memref.load %arg1[%c24] : memref<111xf32, #tpu.memory_space<smem>>
    %102 = vector.broadcast %101 : f32 to vector<8x128xf32>
    %103 = arith.mulf %10, %102 : vector<8x128xf32>
    %104 = arith.addf %100, %103 : vector<8x128xf32>
    %c34 = arith.constant 34 : index
    %105 = memref.load %arg1[%c34] : memref<111xf32, #tpu.memory_space<smem>>
    %106 = vector.broadcast %105 : f32 to vector<8x128xf32>
    %107 = arith.mulf %13, %106 : vector<8x128xf32>
    %108 = arith.addf %104, %107 : vector<8x128xf32>
    %c44 = arith.constant 44 : index
    %109 = memref.load %arg1[%c44] : memref<111xf32, #tpu.memory_space<smem>>
    %110 = vector.broadcast %109 : f32 to vector<8x128xf32>
    %111 = arith.addf %108, %110 : vector<8x128xf32>
    %cst_11 = arith.constant 0.000000e+00 : f32
    %112 = vector.broadcast %cst_11 : f32 to vector<8x128xf32>
    %113 = arith.maximumf %111, %112 : vector<8x128xf32>
    %c5 = arith.constant 5 : index
    %114 = memref.load %arg1[%c5] : memref<111xf32, #tpu.memory_space<smem>>
    %115 = vector.broadcast %114 : f32 to vector<8x128xf32>
    %116 = arith.mulf %4, %115 : vector<8x128xf32>
    %c15 = arith.constant 15 : index
    %117 = memref.load %arg1[%c15] : memref<111xf32, #tpu.memory_space<smem>>
    %118 = vector.broadcast %117 : f32 to vector<8x128xf32>
    %119 = arith.mulf %7, %118 : vector<8x128xf32>
    %120 = arith.addf %116, %119 : vector<8x128xf32>
    %c25 = arith.constant 25 : index
    %121 = memref.load %arg1[%c25] : memref<111xf32, #tpu.memory_space<smem>>
    %122 = vector.broadcast %121 : f32 to vector<8x128xf32>
    %123 = arith.mulf %10, %122 : vector<8x128xf32>
    %124 = arith.addf %120, %123 : vector<8x128xf32>
    %c35 = arith.constant 35 : index
    %125 = memref.load %arg1[%c35] : memref<111xf32, #tpu.memory_space<smem>>
    %126 = vector.broadcast %125 : f32 to vector<8x128xf32>
    %127 = arith.mulf %13, %126 : vector<8x128xf32>
    %128 = arith.addf %124, %127 : vector<8x128xf32>
    %c45 = arith.constant 45 : index
    %129 = memref.load %arg1[%c45] : memref<111xf32, #tpu.memory_space<smem>>
    %130 = vector.broadcast %129 : f32 to vector<8x128xf32>
    %131 = arith.addf %128, %130 : vector<8x128xf32>
    %cst_12 = arith.constant 0.000000e+00 : f32
    %132 = vector.broadcast %cst_12 : f32 to vector<8x128xf32>
    %133 = arith.maximumf %131, %132 : vector<8x128xf32>
    %c6 = arith.constant 6 : index
    %134 = memref.load %arg1[%c6] : memref<111xf32, #tpu.memory_space<smem>>
    %135 = vector.broadcast %134 : f32 to vector<8x128xf32>
    %136 = arith.mulf %4, %135 : vector<8x128xf32>
    %c16 = arith.constant 16 : index
    %137 = memref.load %arg1[%c16] : memref<111xf32, #tpu.memory_space<smem>>
    %138 = vector.broadcast %137 : f32 to vector<8x128xf32>
    %139 = arith.mulf %7, %138 : vector<8x128xf32>
    %140 = arith.addf %136, %139 : vector<8x128xf32>
    %c26 = arith.constant 26 : index
    %141 = memref.load %arg1[%c26] : memref<111xf32, #tpu.memory_space<smem>>
    %142 = vector.broadcast %141 : f32 to vector<8x128xf32>
    %143 = arith.mulf %10, %142 : vector<8x128xf32>
    %144 = arith.addf %140, %143 : vector<8x128xf32>
    %c36 = arith.constant 36 : index
    %145 = memref.load %arg1[%c36] : memref<111xf32, #tpu.memory_space<smem>>
    %146 = vector.broadcast %145 : f32 to vector<8x128xf32>
    %147 = arith.mulf %13, %146 : vector<8x128xf32>
    %148 = arith.addf %144, %147 : vector<8x128xf32>
    %c46 = arith.constant 46 : index
    %149 = memref.load %arg1[%c46] : memref<111xf32, #tpu.memory_space<smem>>
    %150 = vector.broadcast %149 : f32 to vector<8x128xf32>
    %151 = arith.addf %148, %150 : vector<8x128xf32>
    %cst_13 = arith.constant 0.000000e+00 : f32
    %152 = vector.broadcast %cst_13 : f32 to vector<8x128xf32>
    %153 = arith.maximumf %151, %152 : vector<8x128xf32>
    %c7 = arith.constant 7 : index
    %154 = memref.load %arg1[%c7] : memref<111xf32, #tpu.memory_space<smem>>
    %155 = vector.broadcast %154 : f32 to vector<8x128xf32>
    %156 = arith.mulf %4, %155 : vector<8x128xf32>
    %c17 = arith.constant 17 : index
    %157 = memref.load %arg1[%c17] : memref<111xf32, #tpu.memory_space<smem>>
    %158 = vector.broadcast %157 : f32 to vector<8x128xf32>
    %159 = arith.mulf %7, %158 : vector<8x128xf32>
    %160 = arith.addf %156, %159 : vector<8x128xf32>
    %c27 = arith.constant 27 : index
    %161 = memref.load %arg1[%c27] : memref<111xf32, #tpu.memory_space<smem>>
    %162 = vector.broadcast %161 : f32 to vector<8x128xf32>
    %163 = arith.mulf %10, %162 : vector<8x128xf32>
    %164 = arith.addf %160, %163 : vector<8x128xf32>
    %c37 = arith.constant 37 : index
    %165 = memref.load %arg1[%c37] : memref<111xf32, #tpu.memory_space<smem>>
    %166 = vector.broadcast %165 : f32 to vector<8x128xf32>
    %167 = arith.mulf %13, %166 : vector<8x128xf32>
    %168 = arith.addf %164, %167 : vector<8x128xf32>
    %c47 = arith.constant 47 : index
    %169 = memref.load %arg1[%c47] : memref<111xf32, #tpu.memory_space<smem>>
    %170 = vector.broadcast %169 : f32 to vector<8x128xf32>
    %171 = arith.addf %168, %170 : vector<8x128xf32>
    %cst_14 = arith.constant 0.000000e+00 : f32
    %172 = vector.broadcast %cst_14 : f32 to vector<8x128xf32>
    %173 = arith.maximumf %171, %172 : vector<8x128xf32>
    %c8 = arith.constant 8 : index
    %174 = memref.load %arg1[%c8] : memref<111xf32, #tpu.memory_space<smem>>
    %175 = vector.broadcast %174 : f32 to vector<8x128xf32>
    %176 = arith.mulf %4, %175 : vector<8x128xf32>
    %c18 = arith.constant 18 : index
    %177 = memref.load %arg1[%c18] : memref<111xf32, #tpu.memory_space<smem>>
    %178 = vector.broadcast %177 : f32 to vector<8x128xf32>
    %179 = arith.mulf %7, %178 : vector<8x128xf32>
    %180 = arith.addf %176, %179 : vector<8x128xf32>
    %c28 = arith.constant 28 : index
    %181 = memref.load %arg1[%c28] : memref<111xf32, #tpu.memory_space<smem>>
    %182 = vector.broadcast %181 : f32 to vector<8x128xf32>
    %183 = arith.mulf %10, %182 : vector<8x128xf32>
    %184 = arith.addf %180, %183 : vector<8x128xf32>
    %c38 = arith.constant 38 : index
    %185 = memref.load %arg1[%c38] : memref<111xf32, #tpu.memory_space<smem>>
    %186 = vector.broadcast %185 : f32 to vector<8x128xf32>
    %187 = arith.mulf %13, %186 : vector<8x128xf32>
    %188 = arith.addf %184, %187 : vector<8x128xf32>
    %c48 = arith.constant 48 : index
    %189 = memref.load %arg1[%c48] : memref<111xf32, #tpu.memory_space<smem>>
    %190 = vector.broadcast %189 : f32 to vector<8x128xf32>
    %191 = arith.addf %188, %190 : vector<8x128xf32>
    %cst_15 = arith.constant 0.000000e+00 : f32
    %192 = vector.broadcast %cst_15 : f32 to vector<8x128xf32>
    %193 = arith.maximumf %191, %192 : vector<8x128xf32>
    %c9 = arith.constant 9 : index
    %194 = memref.load %arg1[%c9] : memref<111xf32, #tpu.memory_space<smem>>
    %195 = vector.broadcast %194 : f32 to vector<8x128xf32>
    %196 = arith.mulf %4, %195 : vector<8x128xf32>
    %c19 = arith.constant 19 : index
    %197 = memref.load %arg1[%c19] : memref<111xf32, #tpu.memory_space<smem>>
    %198 = vector.broadcast %197 : f32 to vector<8x128xf32>
    %199 = arith.mulf %7, %198 : vector<8x128xf32>
    %200 = arith.addf %196, %199 : vector<8x128xf32>
    %c29 = arith.constant 29 : index
    %201 = memref.load %arg1[%c29] : memref<111xf32, #tpu.memory_space<smem>>
    %202 = vector.broadcast %201 : f32 to vector<8x128xf32>
    %203 = arith.mulf %10, %202 : vector<8x128xf32>
    %204 = arith.addf %200, %203 : vector<8x128xf32>
    %c39 = arith.constant 39 : index
    %205 = memref.load %arg1[%c39] : memref<111xf32, #tpu.memory_space<smem>>
    %206 = vector.broadcast %205 : f32 to vector<8x128xf32>
    %207 = arith.mulf %13, %206 : vector<8x128xf32>
    %208 = arith.addf %204, %207 : vector<8x128xf32>
    %c49 = arith.constant 49 : index
    %209 = memref.load %arg1[%c49] : memref<111xf32, #tpu.memory_space<smem>>
    %210 = vector.broadcast %209 : f32 to vector<8x128xf32>
    %211 = arith.addf %208, %210 : vector<8x128xf32>
    %cst_16 = arith.constant 0.000000e+00 : f32
    %212 = vector.broadcast %cst_16 : f32 to vector<8x128xf32>
    %213 = arith.maximumf %211, %212 : vector<8x128xf32>
    %c50 = arith.constant 50 : index
    %214 = memref.load %arg1[%c50] : memref<111xf32, #tpu.memory_space<smem>>
    %215 = vector.broadcast %214 : f32 to vector<8x128xf32>
    %216 = arith.mulf %33, %215 : vector<8x128xf32>
    %c55 = arith.constant 55 : index
    %217 = memref.load %arg1[%c55] : memref<111xf32, #tpu.memory_space<smem>>
    %218 = vector.broadcast %217 : f32 to vector<8x128xf32>
    %219 = arith.mulf %53, %218 : vector<8x128xf32>
    %220 = arith.addf %216, %219 : vector<8x128xf32>
    %c60 = arith.constant 60 : index
    %221 = memref.load %arg1[%c60] : memref<111xf32, #tpu.memory_space<smem>>
    %222 = vector.broadcast %221 : f32 to vector<8x128xf32>
    %223 = arith.mulf %73, %222 : vector<8x128xf32>
    %224 = arith.addf %220, %223 : vector<8x128xf32>
    %c65 = arith.constant 65 : index
    %225 = memref.load %arg1[%c65] : memref<111xf32, #tpu.memory_space<smem>>
    %226 = vector.broadcast %225 : f32 to vector<8x128xf32>
    %227 = arith.mulf %93, %226 : vector<8x128xf32>
    %228 = arith.addf %224, %227 : vector<8x128xf32>
    %c70 = arith.constant 70 : index
    %229 = memref.load %arg1[%c70] : memref<111xf32, #tpu.memory_space<smem>>
    %230 = vector.broadcast %229 : f32 to vector<8x128xf32>
    %231 = arith.mulf %113, %230 : vector<8x128xf32>
    %232 = arith.addf %228, %231 : vector<8x128xf32>
    %c75 = arith.constant 75 : index
    %233 = memref.load %arg1[%c75] : memref<111xf32, #tpu.memory_space<smem>>
    %234 = vector.broadcast %233 : f32 to vector<8x128xf32>
    %235 = arith.mulf %133, %234 : vector<8x128xf32>
    %236 = arith.addf %232, %235 : vector<8x128xf32>
    %c80 = arith.constant 80 : index
    %237 = memref.load %arg1[%c80] : memref<111xf32, #tpu.memory_space<smem>>
    %238 = vector.broadcast %237 : f32 to vector<8x128xf32>
    %239 = arith.mulf %153, %238 : vector<8x128xf32>
    %240 = arith.addf %236, %239 : vector<8x128xf32>
    %c85 = arith.constant 85 : index
    %241 = memref.load %arg1[%c85] : memref<111xf32, #tpu.memory_space<smem>>
    %242 = vector.broadcast %241 : f32 to vector<8x128xf32>
    %243 = arith.mulf %173, %242 : vector<8x128xf32>
    %244 = arith.addf %240, %243 : vector<8x128xf32>
    %c90 = arith.constant 90 : index
    %245 = memref.load %arg1[%c90] : memref<111xf32, #tpu.memory_space<smem>>
    %246 = vector.broadcast %245 : f32 to vector<8x128xf32>
    %247 = arith.mulf %193, %246 : vector<8x128xf32>
    %248 = arith.addf %244, %247 : vector<8x128xf32>
    %c95 = arith.constant 95 : index
    %249 = memref.load %arg1[%c95] : memref<111xf32, #tpu.memory_space<smem>>
    %250 = vector.broadcast %249 : f32 to vector<8x128xf32>
    %251 = arith.mulf %213, %250 : vector<8x128xf32>
    %252 = arith.addf %248, %251 : vector<8x128xf32>
    %c100 = arith.constant 100 : index
    %253 = memref.load %arg1[%c100] : memref<111xf32, #tpu.memory_space<smem>>
    %254 = vector.broadcast %253 : f32 to vector<8x128xf32>
    %255 = arith.addf %252, %254 : vector<8x128xf32>
    %cst_17 = arith.constant 0.000000e+00 : f32
    %256 = vector.broadcast %cst_17 : f32 to vector<8x128xf32>
    %257 = arith.maximumf %255, %256 : vector<8x128xf32>
    %c51 = arith.constant 51 : index
    %258 = memref.load %arg1[%c51] : memref<111xf32, #tpu.memory_space<smem>>
    %259 = vector.broadcast %258 : f32 to vector<8x128xf32>
    %260 = arith.mulf %33, %259 : vector<8x128xf32>
    %c56 = arith.constant 56 : index
    %261 = memref.load %arg1[%c56] : memref<111xf32, #tpu.memory_space<smem>>
    %262 = vector.broadcast %261 : f32 to vector<8x128xf32>
    %263 = arith.mulf %53, %262 : vector<8x128xf32>
    %264 = arith.addf %260, %263 : vector<8x128xf32>
    %c61 = arith.constant 61 : index
    %265 = memref.load %arg1[%c61] : memref<111xf32, #tpu.memory_space<smem>>
    %266 = vector.broadcast %265 : f32 to vector<8x128xf32>
    %267 = arith.mulf %73, %266 : vector<8x128xf32>
    %268 = arith.addf %264, %267 : vector<8x128xf32>
    %c66 = arith.constant 66 : index
    %269 = memref.load %arg1[%c66] : memref<111xf32, #tpu.memory_space<smem>>
    %270 = vector.broadcast %269 : f32 to vector<8x128xf32>
    %271 = arith.mulf %93, %270 : vector<8x128xf32>
    %272 = arith.addf %268, %271 : vector<8x128xf32>
    %c71 = arith.constant 71 : index
    %273 = memref.load %arg1[%c71] : memref<111xf32, #tpu.memory_space<smem>>
    %274 = vector.broadcast %273 : f32 to vector<8x128xf32>
    %275 = arith.mulf %113, %274 : vector<8x128xf32>
    %276 = arith.addf %272, %275 : vector<8x128xf32>
    %c76 = arith.constant 76 : index
    %277 = memref.load %arg1[%c76] : memref<111xf32, #tpu.memory_space<smem>>
    %278 = vector.broadcast %277 : f32 to vector<8x128xf32>
    %279 = arith.mulf %133, %278 : vector<8x128xf32>
    %280 = arith.addf %276, %279 : vector<8x128xf32>
    %c81 = arith.constant 81 : index
    %281 = memref.load %arg1[%c81] : memref<111xf32, #tpu.memory_space<smem>>
    %282 = vector.broadcast %281 : f32 to vector<8x128xf32>
    %283 = arith.mulf %153, %282 : vector<8x128xf32>
    %284 = arith.addf %280, %283 : vector<8x128xf32>
    %c86 = arith.constant 86 : index
    %285 = memref.load %arg1[%c86] : memref<111xf32, #tpu.memory_space<smem>>
    %286 = vector.broadcast %285 : f32 to vector<8x128xf32>
    %287 = arith.mulf %173, %286 : vector<8x128xf32>
    %288 = arith.addf %284, %287 : vector<8x128xf32>
    %c91 = arith.constant 91 : index
    %289 = memref.load %arg1[%c91] : memref<111xf32, #tpu.memory_space<smem>>
    %290 = vector.broadcast %289 : f32 to vector<8x128xf32>
    %291 = arith.mulf %193, %290 : vector<8x128xf32>
    %292 = arith.addf %288, %291 : vector<8x128xf32>
    %c96 = arith.constant 96 : index
    %293 = memref.load %arg1[%c96] : memref<111xf32, #tpu.memory_space<smem>>
    %294 = vector.broadcast %293 : f32 to vector<8x128xf32>
    %295 = arith.mulf %213, %294 : vector<8x128xf32>
    %296 = arith.addf %292, %295 : vector<8x128xf32>
    %c101 = arith.constant 101 : index
    %297 = memref.load %arg1[%c101] : memref<111xf32, #tpu.memory_space<smem>>
    %298 = vector.broadcast %297 : f32 to vector<8x128xf32>
    %299 = arith.addf %296, %298 : vector<8x128xf32>
    %cst_18 = arith.constant 0.000000e+00 : f32
    %300 = vector.broadcast %cst_18 : f32 to vector<8x128xf32>
    %301 = arith.maximumf %299, %300 : vector<8x128xf32>
    %c52 = arith.constant 52 : index
    %302 = memref.load %arg1[%c52] : memref<111xf32, #tpu.memory_space<smem>>
    %303 = vector.broadcast %302 : f32 to vector<8x128xf32>
    %304 = arith.mulf %33, %303 : vector<8x128xf32>
    %c57 = arith.constant 57 : index
    %305 = memref.load %arg1[%c57] : memref<111xf32, #tpu.memory_space<smem>>
    %306 = vector.broadcast %305 : f32 to vector<8x128xf32>
    %307 = arith.mulf %53, %306 : vector<8x128xf32>
    %308 = arith.addf %304, %307 : vector<8x128xf32>
    %c62 = arith.constant 62 : index
    %309 = memref.load %arg1[%c62] : memref<111xf32, #tpu.memory_space<smem>>
    %310 = vector.broadcast %309 : f32 to vector<8x128xf32>
    %311 = arith.mulf %73, %310 : vector<8x128xf32>
    %312 = arith.addf %308, %311 : vector<8x128xf32>
    %c67 = arith.constant 67 : index
    %313 = memref.load %arg1[%c67] : memref<111xf32, #tpu.memory_space<smem>>
    %314 = vector.broadcast %313 : f32 to vector<8x128xf32>
    %315 = arith.mulf %93, %314 : vector<8x128xf32>
    %316 = arith.addf %312, %315 : vector<8x128xf32>
    %c72 = arith.constant 72 : index
    %317 = memref.load %arg1[%c72] : memref<111xf32, #tpu.memory_space<smem>>
    %318 = vector.broadcast %317 : f32 to vector<8x128xf32>
    %319 = arith.mulf %113, %318 : vector<8x128xf32>
    %320 = arith.addf %316, %319 : vector<8x128xf32>
    %c77 = arith.constant 77 : index
    %321 = memref.load %arg1[%c77] : memref<111xf32, #tpu.memory_space<smem>>
    %322 = vector.broadcast %321 : f32 to vector<8x128xf32>
    %323 = arith.mulf %133, %322 : vector<8x128xf32>
    %324 = arith.addf %320, %323 : vector<8x128xf32>
    %c82 = arith.constant 82 : index
    %325 = memref.load %arg1[%c82] : memref<111xf32, #tpu.memory_space<smem>>
    %326 = vector.broadcast %325 : f32 to vector<8x128xf32>
    %327 = arith.mulf %153, %326 : vector<8x128xf32>
    %328 = arith.addf %324, %327 : vector<8x128xf32>
    %c87 = arith.constant 87 : index
    %329 = memref.load %arg1[%c87] : memref<111xf32, #tpu.memory_space<smem>>
    %330 = vector.broadcast %329 : f32 to vector<8x128xf32>
    %331 = arith.mulf %173, %330 : vector<8x128xf32>
    %332 = arith.addf %328, %331 : vector<8x128xf32>
    %c92 = arith.constant 92 : index
    %333 = memref.load %arg1[%c92] : memref<111xf32, #tpu.memory_space<smem>>
    %334 = vector.broadcast %333 : f32 to vector<8x128xf32>
    %335 = arith.mulf %193, %334 : vector<8x128xf32>
    %336 = arith.addf %332, %335 : vector<8x128xf32>
    %c97 = arith.constant 97 : index
    %337 = memref.load %arg1[%c97] : memref<111xf32, #tpu.memory_space<smem>>
    %338 = vector.broadcast %337 : f32 to vector<8x128xf32>
    %339 = arith.mulf %213, %338 : vector<8x128xf32>
    %340 = arith.addf %336, %339 : vector<8x128xf32>
    %c102 = arith.constant 102 : index
    %341 = memref.load %arg1[%c102] : memref<111xf32, #tpu.memory_space<smem>>
    %342 = vector.broadcast %341 : f32 to vector<8x128xf32>
    %343 = arith.addf %340, %342 : vector<8x128xf32>
    %cst_19 = arith.constant 0.000000e+00 : f32
    %344 = vector.broadcast %cst_19 : f32 to vector<8x128xf32>
    %345 = arith.maximumf %343, %344 : vector<8x128xf32>
    %c53 = arith.constant 53 : index
    %346 = memref.load %arg1[%c53] : memref<111xf32, #tpu.memory_space<smem>>
    %347 = vector.broadcast %346 : f32 to vector<8x128xf32>
    %348 = arith.mulf %33, %347 : vector<8x128xf32>
    %c58 = arith.constant 58 : index
    %349 = memref.load %arg1[%c58] : memref<111xf32, #tpu.memory_space<smem>>
    %350 = vector.broadcast %349 : f32 to vector<8x128xf32>
    %351 = arith.mulf %53, %350 : vector<8x128xf32>
    %352 = arith.addf %348, %351 : vector<8x128xf32>
    %c63 = arith.constant 63 : index
    %353 = memref.load %arg1[%c63] : memref<111xf32, #tpu.memory_space<smem>>
    %354 = vector.broadcast %353 : f32 to vector<8x128xf32>
    %355 = arith.mulf %73, %354 : vector<8x128xf32>
    %356 = arith.addf %352, %355 : vector<8x128xf32>
    %c68 = arith.constant 68 : index
    %357 = memref.load %arg1[%c68] : memref<111xf32, #tpu.memory_space<smem>>
    %358 = vector.broadcast %357 : f32 to vector<8x128xf32>
    %359 = arith.mulf %93, %358 : vector<8x128xf32>
    %360 = arith.addf %356, %359 : vector<8x128xf32>
    %c73 = arith.constant 73 : index
    %361 = memref.load %arg1[%c73] : memref<111xf32, #tpu.memory_space<smem>>
    %362 = vector.broadcast %361 : f32 to vector<8x128xf32>
    %363 = arith.mulf %113, %362 : vector<8x128xf32>
    %364 = arith.addf %360, %363 : vector<8x128xf32>
    %c78 = arith.constant 78 : index
    %365 = memref.load %arg1[%c78] : memref<111xf32, #tpu.memory_space<smem>>
    %366 = vector.broadcast %365 : f32 to vector<8x128xf32>
    %367 = arith.mulf %133, %366 : vector<8x128xf32>
    %368 = arith.addf %364, %367 : vector<8x128xf32>
    %c83 = arith.constant 83 : index
    %369 = memref.load %arg1[%c83] : memref<111xf32, #tpu.memory_space<smem>>
    %370 = vector.broadcast %369 : f32 to vector<8x128xf32>
    %371 = arith.mulf %153, %370 : vector<8x128xf32>
    %372 = arith.addf %368, %371 : vector<8x128xf32>
    %c88 = arith.constant 88 : index
    %373 = memref.load %arg1[%c88] : memref<111xf32, #tpu.memory_space<smem>>
    %374 = vector.broadcast %373 : f32 to vector<8x128xf32>
    %375 = arith.mulf %173, %374 : vector<8x128xf32>
    %376 = arith.addf %372, %375 : vector<8x128xf32>
    %c93 = arith.constant 93 : index
    %377 = memref.load %arg1[%c93] : memref<111xf32, #tpu.memory_space<smem>>
    %378 = vector.broadcast %377 : f32 to vector<8x128xf32>
    %379 = arith.mulf %193, %378 : vector<8x128xf32>
    %380 = arith.addf %376, %379 : vector<8x128xf32>
    %c98 = arith.constant 98 : index
    %381 = memref.load %arg1[%c98] : memref<111xf32, #tpu.memory_space<smem>>
    %382 = vector.broadcast %381 : f32 to vector<8x128xf32>
    %383 = arith.mulf %213, %382 : vector<8x128xf32>
    %384 = arith.addf %380, %383 : vector<8x128xf32>
    %c103 = arith.constant 103 : index
    %385 = memref.load %arg1[%c103] : memref<111xf32, #tpu.memory_space<smem>>
    %386 = vector.broadcast %385 : f32 to vector<8x128xf32>
    %387 = arith.addf %384, %386 : vector<8x128xf32>
    %cst_20 = arith.constant 0.000000e+00 : f32
    %388 = vector.broadcast %cst_20 : f32 to vector<8x128xf32>
    %389 = arith.maximumf %387, %388 : vector<8x128xf32>
    %c54 = arith.constant 54 : index
    %390 = memref.load %arg1[%c54] : memref<111xf32, #tpu.memory_space<smem>>
    %391 = vector.broadcast %390 : f32 to vector<8x128xf32>
    %392 = arith.mulf %33, %391 : vector<8x128xf32>
    %c59 = arith.constant 59 : index
    %393 = memref.load %arg1[%c59] : memref<111xf32, #tpu.memory_space<smem>>
    %394 = vector.broadcast %393 : f32 to vector<8x128xf32>
    %395 = arith.mulf %53, %394 : vector<8x128xf32>
    %396 = arith.addf %392, %395 : vector<8x128xf32>
    %c64 = arith.constant 64 : index
    %397 = memref.load %arg1[%c64] : memref<111xf32, #tpu.memory_space<smem>>
    %398 = vector.broadcast %397 : f32 to vector<8x128xf32>
    %399 = arith.mulf %73, %398 : vector<8x128xf32>
    %400 = arith.addf %396, %399 : vector<8x128xf32>
    %c69 = arith.constant 69 : index
    %401 = memref.load %arg1[%c69] : memref<111xf32, #tpu.memory_space<smem>>
    %402 = vector.broadcast %401 : f32 to vector<8x128xf32>
    %403 = arith.mulf %93, %402 : vector<8x128xf32>
    %404 = arith.addf %400, %403 : vector<8x128xf32>
    %c74 = arith.constant 74 : index
    %405 = memref.load %arg1[%c74] : memref<111xf32, #tpu.memory_space<smem>>
    %406 = vector.broadcast %405 : f32 to vector<8x128xf32>
    %407 = arith.mulf %113, %406 : vector<8x128xf32>
    %408 = arith.addf %404, %407 : vector<8x128xf32>
    %c79 = arith.constant 79 : index
    %409 = memref.load %arg1[%c79] : memref<111xf32, #tpu.memory_space<smem>>
    %410 = vector.broadcast %409 : f32 to vector<8x128xf32>
    %411 = arith.mulf %133, %410 : vector<8x128xf32>
    %412 = arith.addf %408, %411 : vector<8x128xf32>
    %c84 = arith.constant 84 : index
    %413 = memref.load %arg1[%c84] : memref<111xf32, #tpu.memory_space<smem>>
    %414 = vector.broadcast %413 : f32 to vector<8x128xf32>
    %415 = arith.mulf %153, %414 : vector<8x128xf32>
    %416 = arith.addf %412, %415 : vector<8x128xf32>
    %c89 = arith.constant 89 : index
    %417 = memref.load %arg1[%c89] : memref<111xf32, #tpu.memory_space<smem>>
    %418 = vector.broadcast %417 : f32 to vector<8x128xf32>
    %419 = arith.mulf %173, %418 : vector<8x128xf32>
    %420 = arith.addf %416, %419 : vector<8x128xf32>
    %c94 = arith.constant 94 : index
    %421 = memref.load %arg1[%c94] : memref<111xf32, #tpu.memory_space<smem>>
    %422 = vector.broadcast %421 : f32 to vector<8x128xf32>
    %423 = arith.mulf %193, %422 : vector<8x128xf32>
    %424 = arith.addf %420, %423 : vector<8x128xf32>
    %c99 = arith.constant 99 : index
    %425 = memref.load %arg1[%c99] : memref<111xf32, #tpu.memory_space<smem>>
    %426 = vector.broadcast %425 : f32 to vector<8x128xf32>
    %427 = arith.mulf %213, %426 : vector<8x128xf32>
    %428 = arith.addf %424, %427 : vector<8x128xf32>
    %c104 = arith.constant 104 : index
    %429 = memref.load %arg1[%c104] : memref<111xf32, #tpu.memory_space<smem>>
    %430 = vector.broadcast %429 : f32 to vector<8x128xf32>
    %431 = arith.addf %428, %430 : vector<8x128xf32>
    %cst_21 = arith.constant 0.000000e+00 : f32
    %432 = vector.broadcast %cst_21 : f32 to vector<8x128xf32>
    %433 = arith.maximumf %431, %432 : vector<8x128xf32>
    %c105 = arith.constant 105 : index
    %434 = memref.load %arg1[%c105] : memref<111xf32, #tpu.memory_space<smem>>
    %435 = vector.broadcast %434 : f32 to vector<8x128xf32>
    %436 = arith.mulf %257, %435 : vector<8x128xf32>
    %c106 = arith.constant 106 : index
    %437 = memref.load %arg1[%c106] : memref<111xf32, #tpu.memory_space<smem>>
    %438 = vector.broadcast %437 : f32 to vector<8x128xf32>
    %439 = arith.mulf %301, %438 : vector<8x128xf32>
    %440 = arith.addf %436, %439 : vector<8x128xf32>
    %c107 = arith.constant 107 : index
    %441 = memref.load %arg1[%c107] : memref<111xf32, #tpu.memory_space<smem>>
    %442 = vector.broadcast %441 : f32 to vector<8x128xf32>
    %443 = arith.mulf %345, %442 : vector<8x128xf32>
    %444 = arith.addf %440, %443 : vector<8x128xf32>
    %c108 = arith.constant 108 : index
    %445 = memref.load %arg1[%c108] : memref<111xf32, #tpu.memory_space<smem>>
    %446 = vector.broadcast %445 : f32 to vector<8x128xf32>
    %447 = arith.mulf %389, %446 : vector<8x128xf32>
    %448 = arith.addf %444, %447 : vector<8x128xf32>
    %c109 = arith.constant 109 : index
    %449 = memref.load %arg1[%c109] : memref<111xf32, #tpu.memory_space<smem>>
    %450 = vector.broadcast %449 : f32 to vector<8x128xf32>
    %451 = arith.mulf %433, %450 : vector<8x128xf32>
    %452 = arith.addf %448, %451 : vector<8x128xf32>
    %c110 = arith.constant 110 : index
    %453 = memref.load %arg1[%c110] : memref<111xf32, #tpu.memory_space<smem>>
    %454 = vector.broadcast %453 : f32 to vector<8x128xf32>
    %455 = arith.addf %452, %454 : vector<8x128xf32>
    %cst_22 = arith.constant 0.000000e+00 : f32
    %456 = vector.broadcast %cst_22 : f32 to vector<8x128xf32>
    %457 = arith.subf %456, %455 : vector<8x128xf32>
    %458 = arith.negf %457 : vector<8x128xf32>
    %459 = math.exp %458 : vector<8x128xf32>
    %cst_23 = arith.constant 1.000000e+00 : f32
    %460 = vector.broadcast %cst_23 : f32 to vector<8x128xf32>
    %461 = arith.addf %460, %459 : vector<8x128xf32>
    %462 = arith.divf %460, %461 : vector<8x128xf32>
    %c0_24 = arith.constant 0 : index
    %463 = arith.index_cast %1 : i32 to index
    %c0_25 = arith.constant 0 : index
    %464 = vector.load %arg3[%c0_24, %463, %c0_25] : memref<2x8x128xf32, #tpu.memory_space<vmem>>, vector<1x8x128xf32>
    %465 = vector.shape_cast %464 : vector<1x8x128xf32> to vector<8x128xf32>
    %466 = vector.shape_cast %462 : vector<8x128xf32> to vector<1x8x128xf32>
    tpu.vector_store %arg3[%c0_24, %463, %c0_25], %466 {strides = array<i32>} : memref<2x8x128xf32, #tpu.memory_space<vmem>>, vector<1x8x128xf32>,
    %467 = arith.negf %455 : vector<8x128xf32>
    %468 = math.exp %467 : vector<8x128xf32>
    %cst_26 = arith.constant 1.000000e+00 : f32
    %469 = vector.broadcast %cst_26 : f32 to vector<8x128xf32>
    %470 = arith.addf %469, %468 : vector<8x128xf32>
    %471 = arith.divf %469, %470 : vector<8x128xf32>
    %c1_27 = arith.constant 1 : index
    %472 = arith.index_cast %1 : i32 to index
    %c0_28 = arith.constant 0 : index
    %473 = vector.load %arg3[%c1_27, %472, %c0_28] : memref<2x8x128xf32, #tpu.memory_space<vmem>>, vector<1x8x128xf32>
    %474 = vector.shape_cast %473 : vector<1x8x128xf32> to vector<8x128xf32>
    %475 = vector.shape_cast %471 : vector<8x128xf32> to vector<1x8x128xf32>
    tpu.vector_store %arg3[%c1_27, %472, %c0_28], %475 {strides = array<i32>} : memref<2x8x128xf32, #tpu.memory_space<vmem>>, vector<1x8x128xf32>,
    %c1_i32 = arith.constant 1 : i32
    return
  }
  func.func @transform_0(%arg0: i32, %arg1: memref<111xf32, #tpu.memory_space<smem>>) -> (i32, i32, i32) {
    %c0_i32 = arith.constant 0 : i32
    %c0_i32_0 = arith.constant 0 : i32
    %c0_i32_1 = arith.constant 0 : i32
    return %c0_i32, %arg0, %c0_i32_0 : i32, i32, i32
  }
  func.func @transform_1(%arg0: i32, %arg1: memref<111xf32, #tpu.memory_space<smem>>) -> (i32, i32, i32) {
    %c0_i32 = arith.constant 0 : i32
    %c0_i32_0 = arith.constant 0 : i32
    %c0_i32_1 = arith.constant 0 : i32
    return %c0_i32, %arg0, %c0_i32_0 : i32, i32, i32
  }
}

</mosaic_0001>

<llo_original>
// kernel: tpu_custom_call.1
$region0: #{tpu_custom_call.1}
  #allocation0 [shape = 'u32[]', space=smem, size = 0x4, offset = 0x4, fixed_abs, tag = 'smem constant byte address 0x4 - core index']
  #allocation1 [shape = 'u32[144,128]{1,0:T(1,128)}', space=vmem, size = 0x12000, scoped, tag = 'internal scratch']
  #allocation2 [shape = 's32[1]{0}', space=sflag, size = 0x4, scoped, tag = 'scoped memory for tpu_custom_call.1']
  #allocation3 [shape = 'u8[512]{0}', space=smem, size = 0x200, scoped, tag = 'prefetched SMEM operand 0']
  %s0 = inlined_call_operand.hbm [shape: f32[111], index: 0, kind: input, shape index: {}]
  %s1 = inlined_call_operand.hbm [shape: f32[4,8,128], index: 1, kind: input, shape index: {}]
  %s2 = inlined_call_operand.hbm [shape: f32[2,8,128], index: 2, kind: output, shape index: {}]
  %s3 = sld [smem:[#allocation0]]
  $region18: #{tpu_custom_call.1} parent=0
    _
  %s5 = ssub.s32 1, %s3
  %s6 = scalar_select 0, %s5, %s3
  %8 = dma.hbm_to_smem %s0, 16, [#allocation3], [#allocation2]
  %9 = dma.done [#allocation2], 16
  %10 = sfence
  $region1: #{tpu_custom_call.1} parent=0
    #allocation4 [shape = 'u8[16384]{0}', space=vmem, size = 0x4000, scoped, tag = 'input window, operand 1, single buffered']
    #allocation5 [shape = 's32[1]{0}', space=sflag, size = 0x4, scoped, tag = 'scoped memory for tpu_custom_call.1']
    #allocation6 [shape = 's32[1]{0}', space=sflag, size = 0x4, scoped, tag = 'scoped memory for tpu_custom_call.1']
    #allocation7 [shape = 'u8[8192]{0}', space=vmem, size = 0x2000, scoped, tag = 'output window, operand 0, single buffered']
    %11 = vsyncpa [#allocation5], 0
    %12 = vsyncpa [#allocation6], 0
    // Predicated region
    $region2: #{tpu_custom_call.1} parent=1 // pred_check
      _
    $region3: #{tpu_custom_call.1} parent=1 // pred_check_branch
      %14 = sbr.rel (0) target = $region5
    $region4: #{tpu_custom_call.1} parent=1 // pred_region
      %s16 = ssub.s32 512, 512
      %17 = vsyncadd [#allocation5], %s16
      %s18 = sshll.u32 [#allocation4], 4
      %s19 = int_to_ptr.vmem [resolvable:$true] %s18
      %24 = dma.hbm_to_vmem [thread:$0]  %s1, 512, %s19, [#allocation5], 128, 128, 8
    $region5: #{tpu_custom_call.1} parent=1 // pred_fallthru
      _
    // Predicated region
    $region6: #{tpu_custom_call.1} parent=1 // pred_check
      _
    $region7: #{tpu_custom_call.1} parent=1 // pred_check_branch
      %26 = sbr.rel (0) target = $region9
    $region8: #{tpu_custom_call.1} parent=1 // pred_region
      %27 = dma.done [#allocation5], 512
    $region9: #{tpu_custom_call.1} parent=1 // pred_fallthru
      _
    %v28 = vld [vmem:[#allocation4] sm:$0xff]
    %s29 = sadd.s32 0, 8
    %s30 = scalar_lea.vmem [#allocation4], %s29
    %v31 = vld [vmem:[%s30] sm:$0xff]
    %s32 = sadd.s32 0, 16
    %s33 = scalar_lea.vmem [#allocation4], %s32
    %v34 = vld [vmem:[%s33] sm:$0xff]
    %s35 = sadd.s32 0, 24
    %s36 = scalar_lea.vmem [#allocation4], %s35
    %v37 = vld [vmem:[%s36] sm:$0xff]
    %s38 = sld [smem:[#allocation3]]
    %v39 = vstv %s38
    %v40 = vmul.f32 %v28, %v39
    %s41 = sld [smem:[#allocation3 + $0xa]]
    %v42 = vstv %s41
    %v43 = vmul.f32 %v31, %v42
    %v44 = vadd.f32 %v40, %v43
    %s45 = sld [smem:[#allocation3 + $0x14]]
    %v46 = vstv %s45
    %v47 = vmul.f32 %v34, %v46
    %v48 = vadd.f32 %v44, %v47
    %s49 = sld [smem:[#allocation3 + $0x1e]]
    %v50 = vstv %s49
    %v51 = vmul.f32 %v37, %v50
    %v52 = vadd.f32 %v48, %v51
    %s53 = sld [smem:[#allocation3 + $0x28]]
    %v54 = vstv %s53
    %v55 = vadd.f32 %v52, %v54
    %v56 = vmax.f32 %v55, 0.0
    %s57 = sld [smem:[#allocation3 + $0x1]]
    %v58 = vstv %s57
    %v59 = vmul.f32 %v28, %v58
    %s60 = sld [smem:[#allocation3 + $0xb]]
    %v61 = vstv %s60
    %v62 = vmul.f32 %v31, %v61
    %v63 = vadd.f32 %v59, %v62
    %s64 = sld [smem:[#allocation3 + $0x15]]
    %v65 = vstv %s64
    %v66 = vmul.f32 %v34, %v65
    %v67 = vadd.f32 %v63, %v66
    %s68 = sld [smem:[#allocation3 + $0x1f]]
    %v69 = vstv %s68
    %v70 = vmul.f32 %v37, %v69
    %v71 = vadd.f32 %v67, %v70
    %s72 = sld [smem:[#allocation3 + $0x29]]
    %v73 = vstv %s72
    %v74 = vadd.f32 %v71, %v73
    %v75 = vmax.f32 %v74, 0.0
    %s76 = sld [smem:[#allocation3 + $0x2]]
    %v77 = vstv %s76
    %v78 = vmul.f32 %v28, %v77
    %s79 = sld [smem:[#allocation3 + $0xc]]
    %v80 = vstv %s79
    %v81 = vmul.f32 %v31, %v80
    %v82 = vadd.f32 %v78, %v81
    %s83 = sld [smem:[#allocation3 + $0x16]]
    %v84 = vstv %s83
    %v85 = vmul.f32 %v34, %v84
    %v86 = vadd.f32 %v82, %v85
    %s87 = sld [smem:[#allocation3 + $0x20]]
    %v88 = vstv %s87
    %v89 = vmul.f32 %v37, %v88
    %v90 = vadd.f32 %v86, %v89
    %s91 = sld [smem:[#allocation3 + $0x2a]]
    %v92 = vstv %s91
    %v93 = vadd.f32 %v90, %v92
    %v94 = vmax.f32 %v93, 0.0
    %s95 = sld [smem:[#allocation3 + $0x3]]
    %v96 = vstv %s95
    %v97 = vmul.f32 %v28, %v96
    %s98 = sld [smem:[#allocation3 + $0xd]]
    %v99 = vstv %s98
    %v100 = vmul.f32 %v31, %v99
    %v101 = vadd.f32 %v97, %v100
    %s102 = sld [smem:[#allocation3 + $0x17]]
    %v103 = vstv %s102
    %v104 = vmul.f32 %v34, %v103
    %v105 = vadd.f32 %v101, %v104
    %s106 = sld [smem:[#allocation3 + $0x21]]
    %v107 = vstv %s106
    %v108 = vmul.f32 %v37, %v107
    %v109 = vadd.f32 %v105, %v108
    %s110 = sld [smem:[#allocation3 + $0x2b]]
    %v111 = vstv %s110
    %v112 = vadd.f32 %v109, %v111
    %v113 = vmax.f32 %v112, 0.0
    %s114 = sld [smem:[#allocation3 + $0x4]]
    %v115 = vstv %s114
    %v116 = vmul.f32 %v28, %v115
    %s117 = sld [smem:[#allocation3 + $0xe]]
    %v118 = vstv %s117
    %v119 = vmul.f32 %v31, %v118
    %v120 = vadd.f32 %v116, %v119
    %s121 = sld [smem:[#allocation3 + $0x18]]
    %v122 = vstv %s121
    %v123 = vmul.f32 %v34, %v122
    %v124 = vadd.f32 %v120, %v123
    %s125 = sld [smem:[#allocation3 + $0x22]]
    %v126 = vstv %s125
    %v127 = vmul.f32 %v37, %v126
    %v128 = vadd.f32 %v124, %v127
    %s129 = sld [smem:[#allocation3 + $0x2c]]
    %v130 = vstv %s129
    %v131 = vadd.f32 %v128, %v130
    %v132 = vmax.f32 %v131, 0.0
    %s133 = sld [smem:[#allocation3 + $0x5]]
    %v134 = vstv %s133
    %v135 = vmul.f32 %v28, %v134
    %s136 = sld [smem:[#allocation3 + $0xf]]
    %v137 = vstv %s136
    %v138 = vmul.f32 %v31, %v137
    %v139 = vadd.f32 %v135, %v138
    %s140 = sld [smem:[#allocation3 + $0x19]]
    %v141 = vstv %s140
    %v142 = vmul.f32 %v34, %v141
    %v143 = vadd.f32 %v139, %v142
    %s144 = sld [smem:[#allocation3 + $0x23]]
    %v145 = vstv %s144
    %v146 = vmul.f32 %v37, %v145
    %v147 = vadd.f32 %v143, %v146
    %s148 = sld [smem:[#allocation3 + $0x2d]]
    %v149 = vstv %s148
    %v150 = vadd.f32 %v147, %v149
    %v151 = vmax.f32 %v150, 0.0
    %s152 = sld [smem:[#allocation3 + $0x6]]
    %v153 = vstv %s152
    %v154 = vmul.f32 %v28, %v153
    %s155 = sld [smem:[#allocation3 + $0x10]]
    %v156 = vstv %s155
    %v157 = vmul.f32 %v31, %v156
    %v158 = vadd.f32 %v154, %v157
    %s159 = sld [smem:[#allocation3 + $0x1a]]
    %v160 = vstv %s159
    %v161 = vmul.f32 %v34, %v160
    %v162 = vadd.f32 %v158, %v161
    %s163 = sld [smem:[#allocation3 + $0x24]]
    %v164 = vstv %s163
    %v165 = vmul.f32 %v37, %v164
    %v166 = vadd.f32 %v162, %v165
    %s167 = sld [smem:[#allocation3 + $0x2e]]
    %v168 = vstv %s167
    %v169 = vadd.f32 %v166, %v168
    %v170 = vmax.f32 %v169, 0.0
    %s171 = sld [smem:[#allocation3 + $0x7]]
    %v172 = vstv %s171
    %v173 = vmul.f32 %v28, %v172
    %s174 = sld [smem:[#allocation3 + $0x11]]
    %v175 = vstv %s174
    %v176 = vmul.f32 %v31, %v175
    %v177 = vadd.f32 %v173, %v176
    %s178 = sld [smem:[#allocation3 + $0x1b]]
    %v179 = vstv %s178
    %v180 = vmul.f32 %v34, %v179
    %v181 = vadd.f32 %v177, %v180
    %s182 = sld [smem:[#allocation3 + $0x25]]
    %v183 = vstv %s182
    %v184 = vmul.f32 %v37, %v183
    %v185 = vadd.f32 %v181, %v184
    %s186 = sld [smem:[#allocation3 + $0x2f]]
    %v187 = vstv %s186
    %v188 = vadd.f32 %v185, %v187
    %v189 = vmax.f32 %v188, 0.0
    %s190 = sld [smem:[#allocation3 + $0x8]]
    %v191 = vstv %s190
    %v192 = vmul.f32 %v28, %v191
    %s193 = sld [smem:[#allocation3 + $0x12]]
    %v194 = vstv %s193
    %v195 = vmul.f32 %v31, %v194
    %v196 = vadd.f32 %v192, %v195
    %s197 = sld [smem:[#allocation3 + $0x1c]]
    %v198 = vstv %s197
    %v199 = vmul.f32 %v34, %v198
    %v200 = vadd.f32 %v196, %v199
    %s201 = sld [smem:[#allocation3 + $0x26]]
    %v202 = vstv %s201
    %v203 = vmul.f32 %v37, %v202
    %v204 = vadd.f32 %v200, %v203
    %s205 = sld [smem:[#allocation3 + $0x30]]
    %v206 = vstv %s205
    %v207 = vadd.f32 %v204, %v206
    %v208 = vmax.f32 %v207, 0.0
    %s209 = sld [smem:[#allocation3 + $0x9]]
    %v210 = vstv %s209
    %v211 = vmul.f32 %v28, %v210
    %s212 = sld [smem:[#allocation3 + $0x13]]
    %v213 = vstv %s212
    %v214 = vmul.f32 %v31, %v213
    %v215 = vadd.f32 %v211, %v214
    %s216 = sld [smem:[#allocation3 + $0x1d]]
    %v217 = vstv %s216
    %v218 = vmul.f32 %v34, %v217
    %v219 = vadd.f32 %v215, %v218
    %s220 = sld [smem:[#allocation3 + $0x27]]
    %v221 = vstv %s220
    %v222 = vmul.f32 %v37, %v221
    %v223 = vadd.f32 %v219, %v222
    %s224 = sld [smem:[#allocation3 + $0x31]]
    %v225 = vstv %s224
    %v226 = vadd.f32 %v223, %v225
    %v227 = vmax.f32 %v226, 0.0
    %s228 = sld [smem:[#allocation3 + $0x32]]
    %v229 = vstv %s228
    %v230 = vmul.f32 %v56, %v229
    %s231 = sld [smem:[#allocation3 + $0x37]]
    %v232 = vstv %s231
    %v233 = vmul.f32 %v75, %v232
    %v234 = vadd.f32 %v230, %v233
    %s235 = sld [smem:[#allocation3 + $0x3c]]
    %v236 = vstv %s235
    %v237 = vmul.f32 %v94, %v236
    %v238 = vadd.f32 %v234, %v237
    %s239 = sld [smem:[#allocation3 + $0x41]]
    %v240 = vstv %s239
    %v241 = vmul.f32 %v113, %v240
    %v242 = vadd.f32 %v238, %v241
    %s243 = sld [smem:[#allocation3 + $0x46]]
    %v244 = vstv %s243
    %v245 = vmul.f32 %v132, %v244
    %v246 = vadd.f32 %v242, %v245
    %s247 = sld [smem:[#allocation3 + $0x4b]]
    %v248 = vstv %s247
    %v249 = vmul.f32 %v151, %v248
    %v250 = vadd.f32 %v246, %v249
    %s251 = sld [smem:[#allocation3 + $0x50]]
    %v252 = vstv %s251
    %v253 = vmul.f32 %v170, %v252
    %v254 = vadd.f32 %v250, %v253
    %s255 = sld [smem:[#allocation3 + $0x55]]
    %v256 = vstv %s255
    %v257 = vmul.f32 %v189, %v256
    %v258 = vadd.f32 %v254, %v257
    %s259 = sld [smem:[#allocation3 + $0x5a]]
    %v260 = vstv %s259
    %v261 = vmul.f32 %v208, %v260
    %v262 = vadd.f32 %v258, %v261
    %s263 = sld [smem:[#allocation3 + $0x5f]]
    %v264 = vstv %s263
    %v265 = vmul.f32 %v227, %v264
    %v266 = vadd.f32 %v262, %v265
    %s267 = sld [smem:[#allocation3 + $0x64]]
    %v268 = vstv %s267
    %v269 = vadd.f32 %v266, %v268
    %v270 = vmax.f32 %v269, 0.0
    %s271 = sld [smem:[#allocation3 + $0x33]]
    %v272 = vstv %s271
    %v273 = vmul.f32 %v56, %v272
    %s274 = sld [smem:[#allocation3 + $0x38]]
    %v275 = vstv %s274
    %v276 = vmul.f32 %v75, %v275
    %v277 = vadd.f32 %v273, %v276
    %s278 = sld [smem:[#allocation3 + $0x3d]]
    %v279 = vstv %s278
    %v280 = vmul.f32 %v94, %v279
    %v281 = vadd.f32 %v277, %v280
    %s282 = sld [smem:[#allocation3 + $0x42]]
    %v283 = vstv %s282
    %v284 = vmul.f32 %v113, %v283
    %v285 = vadd.f32 %v281, %v284
    %s286 = sld [smem:[#allocation3 + $0x47]]
    %v287 = vstv %s286
    %v288 = vmul.f32 %v132, %v287
    %v289 = vadd.f32 %v285, %v288
    %s290 = sld [smem:[#allocation3 + $0x4c]]
    %v291 = vstv %s290
    %v292 = vmul.f32 %v151, %v291
    %v293 = vadd.f32 %v289, %v292
    %s294 = sld [smem:[#allocation3 + $0x51]]
    %v295 = vstv %s294
    %v296 = vmul.f32 %v170, %v295
    %v297 = vadd.f32 %v293, %v296
    %s298 = sld [smem:[#allocation3 + $0x56]]
    %v299 = vstv %s298
    %v300 = vmul.f32 %v189, %v299
    %v301 = vadd.f32 %v297, %v300
    %s302 = sld [smem:[#allocation3 + $0x5b]]
    %v303 = vstv %s302
    %v304 = vmul.f32 %v208, %v303
    %v305 = vadd.f32 %v301, %v304
    %s306 = sld [smem:[#allocation3 + $0x60]]
    %v307 = vstv %s306
    %v308 = vmul.f32 %v227, %v307
    %v309 = vadd.f32 %v305, %v308
    %s310 = sld [smem:[#allocation3 + $0x65]]
    %v311 = vstv %s310
    %v312 = vadd.f32 %v309, %v311
    %v313 = vmax.f32 %v312, 0.0
    %s314 = sld [smem:[#allocation3 + $0x34]]
    %v315 = vstv %s314
    %v316 = vmul.f32 %v56, %v315
    %s317 = sld [smem:[#allocation3 + $0x39]]
    %v318 = vstv %s317
    %v319 = vmul.f32 %v75, %v318
    %v320 = vadd.f32 %v316, %v319
    %s321 = sld [smem:[#allocation3 + $0x3e]]
    %v322 = vstv %s321
    %v323 = vmul.f32 %v94, %v322
    %v324 = vadd.f32 %v320, %v323
    %s325 = sld [smem:[#allocation3 + $0x43]]
    %v326 = vstv %s325
    %v327 = vmul.f32 %v113, %v326
    %v328 = vadd.f32 %v324, %v327
    %s329 = sld [smem:[#allocation3 + $0x48]]
    %v330 = vstv %s329
    %v331 = vmul.f32 %v132, %v330
    %v332 = vadd.f32 %v328, %v331
    %s333 = sld [smem:[#allocation3 + $0x4d]]
    %v334 = vstv %s333
    %v335 = vmul.f32 %v151, %v334
    %v336 = vadd.f32 %v332, %v335
    %s337 = sld [smem:[#allocation3 + $0x52]]
    %v338 = vstv %s337
    %v339 = vmul.f32 %v170, %v338
    %v340 = vadd.f32 %v336, %v339
    %s341 = sld [smem:[#allocation3 + $0x57]]
    %v342 = vstv %s341
    %v343 = vmul.f32 %v189, %v342
    %v344 = vadd.f32 %v340, %v343
    %s345 = sld [smem:[#allocation3 + $0x5c]]
    %v346 = vstv %s345
    %v347 = vmul.f32 %v208, %v346
    %v348 = vadd.f32 %v344, %v347
    %s349 = sld [smem:[#allocation3 + $0x61]]
    %v350 = vstv %s349
    %v351 = vmul.f32 %v227, %v350
    %v352 = vadd.f32 %v348, %v351
    %s353 = sld [smem:[#allocation3 + $0x66]]
    %v354 = vstv %s353
    %v355 = vadd.f32 %v352, %v354
    %v356 = vmax.f32 %v355, 0.0
    %s357 = sld [smem:[#allocation3 + $0x35]]
    %v358 = vstv %s357
    %v359 = vmul.f32 %v56, %v358
    %s360 = sld [smem:[#allocation3 + $0x3a]]
    %v361 = vstv %s360
    %v362 = vmul.f32 %v75, %v361
    %v363 = vadd.f32 %v359, %v362
    %s364 = sld [smem:[#allocation3 + $0x3f]]
    %v365 = vstv %s364
    %v366 = vmul.f32 %v94, %v365
    %v367 = vadd.f32 %v363, %v366
    %s368 = sld [smem:[#allocation3 + $0x44]]
    %v369 = vstv %s368
    %v370 = vmul.f32 %v113, %v369
    %v371 = vadd.f32 %v367, %v370
    %s372 = sld [smem:[#allocation3 + $0x49]]
    %v373 = vstv %s372
    %v374 = vmul.f32 %v132, %v373
    %v375 = vadd.f32 %v371, %v374
    %s376 = sld [smem:[#allocation3 + $0x4e]]
    %v377 = vstv %s376
    %v378 = vmul.f32 %v151, %v377
    %v379 = vadd.f32 %v375, %v378
    %s380 = sld [smem:[#allocation3 + $0x53]]
    %v381 = vstv %s380
    %v382 = vmul.f32 %v170, %v381
    %v383 = vadd.f32 %v379, %v382
    %s384 = sld [smem:[#allocation3 + $0x58]]
    %v385 = vstv %s384
    %v386 = vmul.f32 %v189, %v385
    %v387 = vadd.f32 %v383, %v386
    %s388 = sld [smem:[#allocation3 + $0x5d]]
    %v389 = vstv %s388
    %v390 = vmul.f32 %v208, %v389
    %v391 = vadd.f32 %v387, %v390
    %s392 = sld [smem:[#allocation3 + $0x62]]
    %v393 = vstv %s392
    %v394 = vmul.f32 %v227, %v393
    %v395 = vadd.f32 %v391, %v394
    %s396 = sld [smem:[#allocation3 + $0x67]]
    %v397 = vstv %s396
    %v398 = vadd.f32 %v395, %v397
    %v399 = vmax.f32 %v398, 0.0
    %s400 = sld [smem:[#allocation3 + $0x36]]
    %v401 = vstv %s400
    %v402 = vmul.f32 %v56, %v401
    %s403 = sld [smem:[#allocation3 + $0x3b]]
    %v404 = vstv %s403
    %v405 = vmul.f32 %v75, %v404
    %v406 = vadd.f32 %v402, %v405
    %s407 = sld [smem:[#allocation3 + $0x40]]
    %v408 = vstv %s407
    %v409 = vmul.f32 %v94, %v408
    %v410 = vadd.f32 %v406, %v409
    %s411 = sld [smem:[#allocation3 + $0x45]]
    %v412 = vstv %s411
    %v413 = vmul.f32 %v113, %v412
    %v414 = vadd.f32 %v410, %v413
    %s415 = sld [smem:[#allocation3 + $0x4a]]
    %v416 = vstv %s415
    %v417 = vmul.f32 %v132, %v416
    %v418 = vadd.f32 %v414, %v417
    %s419 = sld [smem:[#allocation3 + $0x4f]]
    %v420 = vstv %s419
    %v421 = vmul.f32 %v151, %v420
    %v422 = vadd.f32 %v418, %v421
    %s423 = sld [smem:[#allocation3 + $0x54]]
    %v424 = vstv %s423
    %v425 = vmul.f32 %v170, %v424
    %v426 = vadd.f32 %v422, %v425
    %s427 = sld [smem:[#allocation3 + $0x59]]
    %v428 = vstv %s427
    %v429 = vmul.f32 %v189, %v428
    %v430 = vadd.f32 %v426, %v429
    %s431 = sld [smem:[#allocation3 + $0x5e]]
    %v432 = vstv %s431
    %v433 = vmul.f32 %v208, %v432
    %v434 = vadd.f32 %v430, %v433
    %s435 = sld [smem:[#allocation3 + $0x63]]
    %v436 = vstv %s435
    %v437 = vmul.f32 %v227, %v436
    %v438 = vadd.f32 %v434, %v437
    %s439 = sld [smem:[#allocation3 + $0x68]]
    %v440 = vstv %s439
    %v441 = vadd.f32 %v438, %v440
    %v442 = vmax.f32 %v441, 0.0
    %s443 = sld [smem:[#allocation3 + $0x69]]
    %v444 = vstv %s443
    %v445 = vmul.f32 %v270, %v444
    %s446 = sld [smem:[#allocation3 + $0x6a]]
    %v447 = vstv %s446
    %v448 = vmul.f32 %v313, %v447
    %v449 = vadd.f32 %v445, %v448
    %s450 = sld [smem:[#allocation3 + $0x6b]]
    %v451 = vstv %s450
    %v452 = vmul.f32 %v356, %v451
    %v453 = vadd.f32 %v449, %v452
    %s454 = sld [smem:[#allocation3 + $0x6c]]
    %v455 = vstv %s454
    %v456 = vmul.f32 %v399, %v455
    %v457 = vadd.f32 %v453, %v456
    %s458 = sld [smem:[#allocation3 + $0x6d]]
    %v459 = vstv %s458
    %v460 = vmul.f32 %v442, %v459
    %v461 = vadd.f32 %v457, %v460
    %s462 = sld [smem:[#allocation3 + $0x6e]]
    %v463 = vstv %s462
    %v464 = vadd.f32 %v461, %v463
    %v465 = vsub.f32 0.0, %v464
    %v466 = vxor.u32 %v465, 2147483648
    %v467 = vmul.f32 %v466, 1.442695
    %v468 = vpow.pop %v467
    %v469 = vadd.f32 %v468, 1.0
    %v470 = vrcp.pop %v469
    %v471 = vmul.f32 1.0, %v470
    %472 = vst [vmem:[#allocation7] sm:$0xff] %v471
    %v473 = vxor.u32 %v464, 2147483648
    %v474 = vmul.f32 %v473, 1.442695
    %v475 = vpow.pop %v474
    %v476 = vadd.f32 %v475, 1.0
    %v477 = vrcp.pop %v476
    %v478 = vmul.f32 1.0, %v477
    %s479 = scalar_lea.vmem [#allocation7], %s29
    %480 = vst [vmem:[%s479] sm:$0xff] %v478
    // Predicated region
    $region10: #{tpu_custom_call.1} parent=1 // pred_check
      _
    $region11: #{tpu_custom_call.1} parent=1 // pred_check_branch
      %482 = sbr.rel (0) target = $region13
    $region12: #{tpu_custom_call.1} parent=1 // pred_region
      %s484 = ssub.s32 256, 256
      %485 = vsyncadd [#allocation6], %s484
      %s486 = sshll.u32 [#allocation7], 4
      %s487 = int_to_ptr.vmem [resolvable:$true] %s486
      %492 = dma.vmem_to_hbm [thread:$0]  %s487, 256, %s2, [#allocation6], 128, 128, 8
    $region13: #{tpu_custom_call.1} parent=1 // pred_fallthru
      _
    // Predicated region
    $region14: #{tpu_custom_call.1} parent=1 // pred_check
      _
    $region15: #{tpu_custom_call.1} parent=1 // pred_check_branch
      %494 = sbr.rel (0) target = $region17
    $region16: #{tpu_custom_call.1} parent=1 // pred_region
      %495 = dma.done [#allocation6], 256
    $region17: #{tpu_custom_call.1} parent=1 // pred_fallthru
      _
    %496 = vsyncpa [#allocation5], 1
    %497 = vsyncpa [#allocation6], 1

</llo_original>
